<compile_context>
chip_gen: v6e
topology: v6e:2x2x1
jax: 0.10.0
libtpu: 0.0.40
codegen_flags: <defaults>
</compile_context>

<pallas_src>
import jax
import jax.numpy as jnp
from jax.experimental import pallas as pl
from jax.experimental.pallas import tpu as pltpu

IN_DIM = 128        # fc1 input features
HID_DIM = 64        # fc1 output / fc2 input features (logical)
OUT_DIM = 10        # fc2 output features (logical)
HID_PAD = 128       # lane-dense padded hidden width (intermediate stays in vregs)
OUT_PAD = 128       # lane-dense matmul-N for fc2 (sliced to 10 before the store)
DEFAULT_TB = 2048   # batch tile (rows per grid step)
NUM_TC = 2          # TensorCores per chip on v7x (harmless over-split on v5e/v6e)


def _round_up(x, m):
    return ((x + m - 1) // m) * m


def mlp_kernel(x_ref, w1_ref, b1_ref, w2_ref, b2_ref, o_ref):
    # fc1 + ReLU: MXU matmul with f32 accumulation, bias + ReLU on the VPU.
    h = jnp.dot(x_ref[...], w1_ref[...], preferred_element_type=jnp.float32)
    h = jnp.maximum(h + b1_ref[...], 0.0)                      # (tb, 128) lane-dense
    # fc2: lane-dense matmul (N padded to 128), then store only the 10 logical lanes.
    y = jnp.dot(h, w2_ref[...], preferred_element_type=jnp.float32)   # (tb, 128)
    o_ref[...] = (y[:, :OUT_DIM] + b2_ref[...]).astype(o_ref.dtype)   # (tb, 10)


def pad_params(w1, b1, w2, b2):
    """Pad once (outside the per-call path).  Zero padding is numerically inert:
    padded hidden lanes are ReLU(0 + 0) = 0 and hit zero rows of w2."""
    w1p = jnp.pad(w1, ((0, 0), (0, HID_PAD - HID_DIM)))                     # (128, 128)
    b1p = jnp.pad(b1.reshape(1, HID_DIM), ((0, 0), (0, HID_PAD - HID_DIM)))  # (1, 128)
    w2p = jnp.pad(w2, ((0, HID_PAD - HID_DIM), (0, OUT_PAD - OUT_DIM)))      # (128, 128)
    b2p = b2.reshape(1, OUT_DIM)                                             # (1, 10)
    return w1p, b1p, w2p, b2p


def simple_model_forward(x, padded_params, *, tb=DEFAULT_TB):
    """x: (B, 128) f32.  padded_params: output of pad_params()."""
    w1p, b1p, w2p, b2p = padded_params
    B = x.shape[0]

    # Cap the tile so (a) it never exceeds B and (b) there are enough grid steps to
    # shard the "parallel" axis across both v7x TensorCores (aim for >= 2*NUM_TC steps).
    tb = min(tb, B, max(8, _round_up(pl.cdiv(B, 2 * NUM_TC), 8)))
    grid = (pl.cdiv(B, tb),)

    grid_spec = pl.GridSpec(
        grid=grid,
        in_specs=[
            pl.BlockSpec((tb, IN_DIM), lambda i: (i, 0)),       # x tiles stream in
            pl.BlockSpec((IN_DIM, HID_PAD), lambda i: (0, 0)),  # weights stay resident
            pl.BlockSpec((1, HID_PAD), lambda i: (0, 0)),
            pl.BlockSpec((HID_PAD, OUT_PAD), lambda i: (0, 0)),
            pl.BlockSpec((1, OUT_DIM), lambda i: (0, 0)),
        ],
        out_specs=pl.BlockSpec((tb, OUT_DIM), lambda i: (i, 0)),  # logical 10-wide output
    )

    # HBM-bound kernel: dominant traffic is x in / logical y out.
    cost = pl.CostEstimate(
        flops=2 * B * (IN_DIM * HID_PAD + HID_PAD * OUT_PAD),
        transcendentals=0,
        bytes_accessed=(
            B * IN_DIM * 4                # x
            + B * OUT_DIM * 4             # logical output
            + (IN_DIM * HID_PAD + HID_PAD + HID_PAD * OUT_PAD + OUT_DIM) * 4
        ),
    )

    return pl.pallas_call(
        mlp_kernel,
        out_shape=jax.ShapeDtypeStruct((B, OUT_DIM), jnp.float32),
        grid_spec=grid_spec,
        compiler_params=pltpu.CompilerParams(
            dimension_semantics=("parallel",)),   # rows independent -> 2-TC shard on v7x
        cost_estimate=cost,
    )(x, w1p, b1p, w2p, b2p)


def init_params(key):
    """Deterministic init mimicking PyTorch nn.Linear default U[-1/sqrt(fan_in), +1/sqrt(fan_in)]."""
    k1, k2, k3, k4 = jax.random.split(key, 4)
    bound1 = 1.0 / jnp.sqrt(IN_DIM)
    bound2 = 1.0 / jnp.sqrt(HID_DIM)
    # Stored as (in, out) so the kernel computes x @ W directly.
    w1 = jax.random.uniform(k1, (IN_DIM, HID_DIM), jnp.float32, -bound1, bound1)
    b1 = jax.random.uniform(k2, (HID_DIM,), jnp.float32, -bound1, bound1)
    w2 = jax.random.uniform(k3, (HID_DIM, OUT_DIM), jnp.float32, -bound2, bound2)
    b2 = jax.random.uniform(k4, (OUT_DIM,), jnp.float32, -bound2, bound2)
    return w1, b1, w2, b2


if __name__ == "__main__":
    key = jax.random.PRNGKey(0)
    kx, kp = jax.random.split(key)
    B = 8
    x = jax.random.normal(kx, (B, IN_DIM), jnp.float32)
    w1, b1, w2, b2 = init_params(kp)
    padded = pad_params(w1, b1, w2, b2)   # pad once, reuse every call

    out = simple_model_forward(x, padded)
    jax.block_until_ready(out)

    # Pure-JAX reference (PyTorch semantics: relu(x @ W1 + b1) @ W2 + b2)
    ref = jnp.maximum(x @ w1 + b1, 0.0) @ w2 + b2
    assert out.shape == (B, OUT_DIM)
    assert jnp.allclose(out, ref, atol=1e-5, rtol=1e-5)

    print("KERNEL_OK")
</pallas_src>

<mosaic_0001>
module attributes {stable_mosaic.version = 11 : i64} {
  func.func @mlp_kernel(%arg0: i32, %arg1: memref<8x128xf32, #tpu.memory_space<vmem>>, %arg2: memref<128x128xf32, #tpu.memory_space<vmem>>, %arg3: memref<1x128xf32, #tpu.memory_space<vmem>>, %arg4: memref<128x128xf32, #tpu.memory_space<vmem>>, %arg5: memref<1x10xf32, #tpu.memory_space<vmem>>, %arg6: memref<8x10xf32, #tpu.memory_space<vmem>>) attributes {dimension_semantics = [#tpu.dimension_semantics<parallel>], iteration_bounds = array<i64: 1>, scalar_prefetch = 0 : i64, scratch_operands = 0 : i64, tpu.core_type = #tpu.core_type<tc>, window_params = [{transform_indices = @transform_0, window_bounds = array<i64: 8, 128>}, {pipeline_mode = #tpu.pipeline_mode<synchronous>, transform_indices = @transform_1, window_bounds = array<i64: 128, 128>}, {pipeline_mode = #tpu.pipeline_mode<synchronous>, transform_indices = @transform_2, window_bounds = array<i64: 1, 128>}, {pipeline_mode = #tpu.pipeline_mode<synchronous>, transform_indices = @transform_3, window_bounds = array<i64: 128, 128>}, {pipeline_mode = #tpu.pipeline_mode<synchronous>, transform_indices = @transform_4, window_bounds = array<i64: 1, 10>}, {transform_indices = @transform_5, window_bounds = array<i64: 8, 10>}]} {
    %c0 = arith.constant 0 : index
    %c0_0 = arith.constant 0 : index
    %0 = vector.load %arg1[%c0, %c0_0] : memref<8x128xf32, #tpu.memory_space<vmem>>, vector<8x128xf32>
    %c0_1 = arith.constant 0 : index
    %c0_2 = arith.constant 0 : index
    %1 = vector.load %arg2[%c0_1, %c0_2] : memref<128x128xf32, #tpu.memory_space<vmem>>, vector<128x128xf32>
    %cst = arith.constant dense<0.000000e+00> : vector<8x128xf32>
    %2 = tpu.matmul %0, %1, %cst {dimension_numbers = #tpu.dot_dimension_numbers<[1], [0], [0], [1], [0, 0, 1, 1], [], []>} : vector<8x128xf32>, vector<128x128xf32>, vector<8x128xf32> -> vector<8x128xf32>
    %c0_3 = arith.constant 0 : index
    %c0_4 = arith.constant 0 : index
    %3 = vector.load %arg3[%c0_3, %c0_4] : memref<1x128xf32, #tpu.memory_space<vmem>>, vector<1x128xf32>
    %4 = vector.broadcast %3 : vector<1x128xf32> to vector<8x128xf32>
    %5 = arith.addf %2, %4 : vector<8x128xf32>
    %cst_5 = arith.constant 0.000000e+00 : f32
    %6 = vector.broadcast %cst_5 : f32 to vector<8x128xf32>
    %7 = arith.maximumf %5, %6 : vector<8x128xf32>
    %c0_6 = arith.constant 0 : index
    %c0_7 = arith.constant 0 : index
    %8 = vector.load %arg4[%c0_6, %c0_7] : memref<128x128xf32, #tpu.memory_space<vmem>>, vector<128x128xf32>
    %cst_8 = arith.constant dense<0.000000e+00> : vector<8x128xf32>
    %9 = tpu.matmul %7, %8, %cst_8 {dimension_numbers = #tpu.dot_dimension_numbers<[1], [0], [0], [1], [0, 0, 1, 1], [], []>} : vector<8x128xf32>, vector<128x128xf32>, vector<8x128xf32> -> vector<8x128xf32>
    %10 = vector.extract_strided_slice %9 {offsets = [0, 0], sizes = [8, 10], strides = [1, 1]} : vector<8x128xf32> to vector<8x10xf32>
    %c0_9 = arith.constant 0 : index
    %c0_10 = arith.constant 0 : index
    %11 = vector.load %arg5[%c0_9, %c0_10] : memref<1x10xf32, #tpu.memory_space<vmem>>, vector<1x10xf32>
    %12 = vector.broadcast %11 : vector<1x10xf32> to vector<8x10xf32>
    %13 = arith.addf %10, %12 : vector<8x10xf32>
    %c0_11 = arith.constant 0 : index
    %c0_12 = arith.constant 0 : index
    %14 = vector.load %arg6[%c0_11, %c0_12] : memref<8x10xf32, #tpu.memory_space<vmem>>, vector<8x10xf32>
    tpu.vector_store %arg6[%c0_11, %c0_12], %13 {strides = array<i32>} : memref<8x10xf32, #tpu.memory_space<vmem>>, vector<8x10xf32>,
    return
  }
  func.func @transform_0(%arg0: i32) -> (i32, i32) {
    %c0_i32 = arith.constant 0 : i32
    %c0_i32_0 = arith.constant 0 : i32
    return %arg0, %c0_i32 : i32, i32
  }
  func.func @transform_1(%arg0: i32) -> (i32, i32) {
    %c0_i32 = arith.constant 0 : i32
    %c0_i32_0 = arith.constant 0 : i32
    %c0_i32_1 = arith.constant 0 : i32
    return %c0_i32, %c0_i32_0 : i32, i32
  }
  func.func @transform_2(%arg0: i32) -> (i32, i32) {
    %c0_i32 = arith.constant 0 : i32
    %c0_i32_0 = arith.constant 0 : i32
    %c0_i32_1 = arith.constant 0 : i32
    return %c0_i32, %c0_i32_0 : i32, i32
  }
  func.func @transform_3(%arg0: i32) -> (i32, i32) {
    %c0_i32 = arith.constant 0 : i32
    %c0_i32_0 = arith.constant 0 : i32
    %c0_i32_1 = arith.constant 0 : i32
    return %c0_i32, %c0_i32_0 : i32, i32
  }
  func.func @transform_4(%arg0: i32) -> (i32, i32) {
    %c0_i32 = arith.constant 0 : i32
    %c0_i32_0 = arith.constant 0 : i32
    %c0_i32_1 = arith.constant 0 : i32
    return %c0_i32, %c0_i32_0 : i32, i32
  }
  func.func @transform_5(%arg0: i32) -> (i32, i32) {
    %c0_i32 = arith.constant 0 : i32
    %c0_i32_0 = arith.constant 0 : i32
    return %arg0, %c0_i32 : i32, i32
  }
}

</mosaic_0001>

<llo_original>
// kernel: tpu_custom_call.1
$region0: #{tpu_custom_call.1}
  #allocation0 [shape = 'u32[]', space=smem, size = 0x4, offset = 0x4, fixed_abs, tag = 'smem constant byte address 0x4 - core index']
  #allocation1 [shape = 'u32[144,128]{1,0:T(1,128)}', space=vmem, size = 0x12000, scoped, tag = 'internal scratch']
  %s0 = inlined_call_operand.hbm [shape: f32[8,128], index: 0, kind: input, shape index: {}]
  %s1 = inlined_call_operand.hbm [shape: f32[128,128], index: 1, kind: input, shape index: {}]
  %s2 = inlined_call_operand.vmem [shape: f32[1,128], index: 2, kind: input, shape index: {}]
  %s3 = inlined_call_operand.hbm [shape: f32[128,128], index: 3, kind: input, shape index: {}]
  %s4 = inlined_call_operand.vmem [shape: f32[1,10], index: 4, kind: input, shape index: {}]
  %s5 = inlined_call_operand.hbm [shape: f32[8,10], index: 5, kind: output, shape index: {}]
  %s6 = sld [smem:[#allocation0]]
  $region42: #{tpu_custom_call.1} parent=0
    _
  %s8 = ssub.s32 1, %s6
  %s9 = scalar_select 0, %s8, %s6
  $region1: #{tpu_custom_call.1} parent=0
    #allocation2 [shape = 'u8[4096]{0}', space=vmem, size = 0x1000, scoped, tag = 'input window, operand 0, single buffered']
    #allocation3 [shape = 's32[1]{0}', space=sflag, size = 0x4, scoped, tag = 'scoped memory for tpu_custom_call.1']
    #allocation4 [shape = 's32[1]{0}', space=sflag, size = 0x4, scoped, tag = 'scoped memory for tpu_custom_call.1']
    #allocation5 [shape = 'u8[65536]{0}', space=vmem, size = 0x10000, scoped, tag = 'input window, operand 1, single buffered']
    #allocation6 [shape = 's32[1]{0}', space=sflag, size = 0x4, scoped, tag = 'scoped memory for tpu_custom_call.1']
    #allocation7 [shape = 'u8[65536]{0}', space=vmem, size = 0x10000, scoped, tag = 'input window, operand 3, single buffered']
    #allocation8 [shape = 'u8[4096]{0}', space=vmem, size = 0x1000, scoped, tag = 'output window, operand 0, single buffered']
    %10 = vsyncpa [#allocation3], 0
    %11 = vsyncpa [#allocation6], 0
    %12 = vsyncpa [#allocation4], 0
    // Predicated region
    $region2: #{tpu_custom_call.1} parent=1 // pred_check
      _
    $region3: #{tpu_custom_call.1} parent=1 // pred_check_branch
      %14 = sbr.rel (0) target = $region5
    $region4: #{tpu_custom_call.1} parent=1 // pred_region
      %s16 = ssub.s32 128, 128
      %17 = vsyncadd [#allocation3], %s16
      %s19 = sshll.u32 [#allocation2], 4
      %s20 = int_to_ptr.vmem [resolvable:$true] %s19
      %22 = dma.hbm_to_vmem [thread:$0]  %s0, 128, %s20, [#allocation3]
    $region5: #{tpu_custom_call.1} parent=1 // pred_fallthru
      _
    // Predicated region
    $region6: #{tpu_custom_call.1} parent=1 // pred_check
      _
    $region7: #{tpu_custom_call.1} parent=1 // pred_check_branch
      %24 = sbr.rel (0) target = $region9
    $region8: #{tpu_custom_call.1} parent=1 // pred_region
      %s26 = ssub.s32 2048, 2048
      %27 = vsyncadd [#allocation6], %s26
      %s28 = sshll.u32 [#allocation5], 4
      %s29 = int_to_ptr.vmem [resolvable:$true] %s28
      %34 = dma.hbm_to_vmem [thread:$0]  %s1, 2048, %s29, [#allocation6], 128, 128, 8
    $region9: #{tpu_custom_call.1} parent=1 // pred_fallthru
      _
    // Predicated region
    $region10: #{tpu_custom_call.1} parent=1 // pred_check
      _
    $region11: #{tpu_custom_call.1} parent=1 // pred_check_branch
      %36 = sbr.rel (0) target = $region13
    $region12: #{tpu_custom_call.1} parent=1 // pred_region
      _
    $region13: #{tpu_custom_call.1} parent=1 // pred_fallthru
      _
    // Predicated region
    $region14: #{tpu_custom_call.1} parent=1 // pred_check
      _
    $region15: #{tpu_custom_call.1} parent=1 // pred_check_branch
      %38 = sbr.rel (0) target = $region17
    $region16: #{tpu_custom_call.1} parent=1 // pred_region
      %s40 = ssub.s32 2048, 2048
      %41 = vsyncadd [#allocation6], %s40
      %s42 = sshll.u32 [#allocation7], 4
      %s43 = int_to_ptr.vmem [resolvable:$true] %s42
      %48 = dma.hbm_to_vmem [thread:$0]  %s3, 2048, %s43, [#allocation6], 128, 128, 8
    $region17: #{tpu_custom_call.1} parent=1 // pred_fallthru
      _
    // Predicated region
    $region18: #{tpu_custom_call.1} parent=1 // pred_check
      _
    $region19: #{tpu_custom_call.1} parent=1 // pred_check_branch
      %50 = sbr.rel (0) target = $region21
    $region20: #{tpu_custom_call.1} parent=1 // pred_region
      _
    $region21: #{tpu_custom_call.1} parent=1 // pred_fallthru
      _
    // Predicated region
    $region22: #{tpu_custom_call.1} parent=1 // pred_check
      _
    $region23: #{tpu_custom_call.1} parent=1 // pred_check_branch
      %52 = sbr.rel (0) target = $region25
    $region24: #{tpu_custom_call.1} parent=1 // pred_region
      %53 = dma.done [#allocation3], 128
    $region25: #{tpu_custom_call.1} parent=1 // pred_fallthru
      _
    // Predicated region
    $region26: #{tpu_custom_call.1} parent=1 // pred_check
      _
    $region27: #{tpu_custom_call.1} parent=1 // pred_check_branch
      %55 = sbr.rel (0) target = $region29
    $region28: #{tpu_custom_call.1} parent=1 // pred_region
      %56 = dma.done [#allocation6], 2048
    $region29: #{tpu_custom_call.1} parent=1 // pred_fallthru
      _
    // Predicated region
    $region30: #{tpu_custom_call.1} parent=1 // pred_check
      _
    $region31: #{tpu_custom_call.1} parent=1 // pred_check_branch
      %58 = sbr.rel (0) target = $region33
    $region32: #{tpu_custom_call.1} parent=1 // pred_region
      %59 = dma.done [#allocation6], 2048
    $region33: #{tpu_custom_call.1} parent=1 // pred_fallthru
      _
    %v60 = vld [vmem:[#allocation2] sm:$0xff]
    %v61 = vld [vmem:[#allocation5] sm:$0xff]
    %v62 = vld [vmem:[#allocation5 + $0x8] sm:$0xff]
    %v63 = vld [vmem:[#allocation5 + $0x10] sm:$0xff]
    %v64 = vld [vmem:[#allocation5 + $0x18] sm:$0xff]
    %v65 = vld [vmem:[#allocation5 + $0x20] sm:$0xff]
    %v66 = vld [vmem:[#allocation5 + $0x28] sm:$0xff]
    %v67 = vld [vmem:[#allocation5 + $0x30] sm:$0xff]
    %v68 = vld [vmem:[#allocation5 + $0x38] sm:$0xff]
    %v69 = vld [vmem:[#allocation5 + $0x40] sm:$0xff]
    %v70 = vld [vmem:[#allocation5 + $0x48] sm:$0xff]
    %v71 = vld [vmem:[#allocation5 + $0x50] sm:$0xff]
    %v72 = vld [vmem:[#allocation5 + $0x58] sm:$0xff]
    %v73 = vld [vmem:[#allocation5 + $0x60] sm:$0xff]
    %v74 = vld [vmem:[#allocation5 + $0x68] sm:$0xff]
    %v75 = vld [vmem:[#allocation5 + $0x70] sm:$0xff]
    %v76 = vld [vmem:[#allocation5 + $0x78] sm:$0xff]
    %v77 = vld [vmem:[%s2] sm:$0x1]
    %v79 = vlaneseq
    %v80 = vshrl.u32 %v79, 7
    %v81 = vsub.s32 0, %v80
    %v82 = vrot.slane %v77, %v81
    %84 = vmatprep.subr.mxu0 0.0
    %85 = vmatpush1.msra.mxu0 %v76
    %86 = vmatprep.subr.mxu0 0.0
    %87 = vmatpush1.msra.mxu0 %v75
    %88 = vmatprep.subr.mxu0 0.0
    %89 = vmatpush1.msra.mxu0 %v74
    %90 = vmatprep.subr.mxu0 0.0
    %91 = vmatpush1.msra.mxu0 %v73
    %92 = vmatprep.subr.mxu0 0.0
    %93 = vmatpush1.msra.mxu0 %v72
    %94 = vmatprep.subr.mxu0 0.0
    %95 = vmatpush1.msra.mxu0 %v71
    %96 = vmatprep.subr.mxu0 0.0
    %97 = vmatpush1.msra.mxu0 %v70
    %98 = vmatprep.subr.mxu0 0.0
    %99 = vmatpush1.msra.mxu0 %v69
    %100 = vmatprep.subr.mxu0 0.0
    %101 = vmatpush1.msra.mxu0 %v68
    %102 = vmatprep.subr.mxu0 0.0
    %103 = vmatpush1.msra.mxu0 %v67
    %104 = vmatprep.subr.mxu0 0.0
    %105 = vmatpush1.msra.mxu0 %v66
    %106 = vmatprep.subr.mxu0 0.0
    %107 = vmatpush1.msra.mxu0 %v65
    %108 = vmatprep.subr.mxu0 0.0
    %109 = vmatpush1.msra.mxu0 %v64
    %110 = vmatprep.subr.mxu0 0.0
    %111 = vmatpush1.msra.mxu0 %v63
    %112 = vmatprep.subr.mxu0 0.0
    %113 = vmatpush1.msra.mxu0 %v62
    %114 = vmatprep.subr.mxu0 0.0
    %115 = vmatpush1.msra.mxu0 %v61
    %116 = vmatprep.subr.mxu0 0.0
    %117 = vmatpush2.msra.mxu0 0.0
    %118 = vmatprep.subr.mxu0 0.0
    %119 = vmatpush2.msra.mxu0 0.0
    %120 = vmatprep.subr.mxu0 0.0
    %121 = vmatpush2.msra.mxu0 0.0
    %122 = vmatprep.subr.mxu0 0.0
    %123 = vmatpush2.msra.mxu0 0.0
    %124 = vmatprep.subr.mxu0 0.0
    %125 = vmatpush2.msra.mxu0 0.0
    %126 = vmatprep.subr.mxu0 0.0
    %127 = vmatpush2.msra.mxu0 0.0
    %128 = vmatprep.subr.mxu0 0.0
    %129 = vmatpush2.msra.mxu0 0.0
    %130 = vmatprep.subr.mxu0 0.0
    %131 = vmatpush2.msra.mxu0 0.0
    %132 = vmatprep.subr.mxu0 0.0
    %133 = vmatpush2.msra.mxu0 0.0
    %134 = vmatprep.subr.mxu0 0.0
    %135 = vmatpush2.msra.mxu0 0.0
    %136 = vmatprep.subr.mxu0 0.0
    %137 = vmatpush2.msra.mxu0 0.0
    %138 = vmatprep.subr.mxu0 0.0
    %139 = vmatpush2.msra.mxu0 0.0
    %140 = vmatprep.subr.mxu0 0.0
    %141 = vmatpush2.msra.mxu0 0.0
    %142 = vmatprep.subr.mxu0 0.0
    %143 = vmatpush2.msra.mxu0 0.0
    %144 = vmatprep.subr.mxu0 0.0
    %145 = vmatpush2.msra.mxu0 0.0
    %146 = vmatprep.subr.mxu0 0.0
    %147 = vmatpush2.msra.mxu0 0.0
    %148 = vmatprep.mubr.f32.mxu0 0.0
    %149 = vmatmul.mubr.f32.gmra.mxu0 %v60
    %v150 = vpop.f32.mrf.mxu0
    %v151 = vadd.f32 %v82, %v150
    %v152 = vpop.f32.mrf.mxu0
    %153 = vdwg.mxu0
    %v154 = vmax.f32 %v151, 0.0
    %v155 = vld [vmem:[#allocation7] sm:$0xff]
    %v156 = vld [vmem:[#allocation7 + $0x8] sm:$0xff]
    %v157 = vld [vmem:[#allocation7 + $0x10] sm:$0xff]
    %v158 = vld [vmem:[#allocation7 + $0x18] sm:$0xff]
    %v159 = vld [vmem:[#allocation7 + $0x20] sm:$0xff]
    %v160 = vld [vmem:[#allocation7 + $0x28] sm:$0xff]
    %v161 = vld [vmem:[#allocation7 + $0x30] sm:$0xff]
    %v162 = vld [vmem:[#allocation7 + $0x38] sm:$0xff]
    %v163 = vld [vmem:[#allocation7 + $0x40] sm:$0xff]
    %v164 = vld [vmem:[#allocation7 + $0x48] sm:$0xff]
    %v165 = vld [vmem:[#allocation7 + $0x50] sm:$0xff]
    %v166 = vld [vmem:[#allocation7 + $0x58] sm:$0xff]
    %v167 = vld [vmem:[#allocation7 + $0x60] sm:$0xff]
    %v168 = vld [vmem:[#allocation7 + $0x68] sm:$0xff]
    %v169 = vld [vmem:[#allocation7 + $0x70] sm:$0xff]
    %v170 = vld [vmem:[#allocation7 + $0x78] sm:$0xff]
    %171 = vmatprep.subr.mxu0 0.0
    %172 = vmatpush1.msra.mxu0 %v170
    %173 = vmatprep.subr.mxu0 0.0
    %174 = vmatpush1.msra.mxu0 %v169
    %175 = vmatprep.subr.mxu0 0.0
    %176 = vmatpush1.msra.mxu0 %v168
    %177 = vmatprep.subr.mxu0 0.0
    %178 = vmatpush1.msra.mxu0 %v167
    %179 = vmatprep.subr.mxu0 0.0
    %180 = vmatpush1.msra.mxu0 %v166
    %181 = vmatprep.subr.mxu0 0.0
    %182 = vmatpush1.msra.mxu0 %v165
    %183 = vmatprep.subr.mxu0 0.0
    %184 = vmatpush1.msra.mxu0 %v164
    %185 = vmatprep.subr.mxu0 0.0
    %186 = vmatpush1.msra.mxu0 %v163
    %187 = vmatprep.subr.mxu0 0.0
    %188 = vmatpush1.msra.mxu0 %v162
    %189 = vmatprep.subr.mxu0 0.0
    %190 = vmatpush1.msra.mxu0 %v161
    %191 = vmatprep.subr.mxu0 0.0
    %192 = vmatpush1.msra.mxu0 %v160
    %193 = vmatprep.subr.mxu0 0.0
    %194 = vmatpush1.msra.mxu0 %v159
    %195 = vmatprep.subr.mxu0 0.0
    %196 = vmatpush1.msra.mxu0 %v158
    %197 = vmatprep.subr.mxu0 0.0
    %198 = vmatpush1.msra.mxu0 %v157
    %199 = vmatprep.subr.mxu0 0.0
    %200 = vmatpush1.msra.mxu0 %v156
    %201 = vmatprep.subr.mxu0 0.0
    %202 = vmatpush1.msra.mxu0 %v155
    %203 = vmatprep.subr.mxu0 0.0
    %204 = vmatpush2.msra.mxu0 0.0
    %205 = vmatprep.subr.mxu0 0.0
    %206 = vmatpush2.msra.mxu0 0.0
    %207 = vmatprep.subr.mxu0 0.0
    %208 = vmatpush2.msra.mxu0 0.0
    %209 = vmatprep.subr.mxu0 0.0
    %210 = vmatpush2.msra.mxu0 0.0
    %211 = vmatprep.subr.mxu0 0.0
    %212 = vmatpush2.msra.mxu0 0.0
    %213 = vmatprep.subr.mxu0 0.0
    %214 = vmatpush2.msra.mxu0 0.0
    %215 = vmatprep.subr.mxu0 0.0
    %216 = vmatpush2.msra.mxu0 0.0
    %217 = vmatprep.subr.mxu0 0.0
    %218 = vmatpush2.msra.mxu0 0.0
    %219 = vmatprep.subr.mxu0 0.0
    %220 = vmatpush2.msra.mxu0 0.0
    %221 = vmatprep.subr.mxu0 0.0
    %222 = vmatpush2.msra.mxu0 0.0
    %223 = vmatprep.subr.mxu0 0.0
    %224 = vmatpush2.msra.mxu0 0.0
    %225 = vmatprep.subr.mxu0 0.0
    %226 = vmatpush2.msra.mxu0 0.0
    %227 = vmatprep.subr.mxu0 0.0
    %228 = vmatpush2.msra.mxu0 0.0
    %229 = vmatprep.subr.mxu0 0.0
    %230 = vmatpush2.msra.mxu0 0.0
    %231 = vmatprep.subr.mxu0 0.0
    %232 = vmatpush2.msra.mxu0 0.0
    %233 = vmatprep.subr.mxu0 0.0
    %234 = vmatpush2.msra.mxu0 0.0
    %235 = vmatprep.mubr.f32.mxu0 0.0
    %236 = vmatmul.mubr.f32.gmra.mxu0 %v154
    %v237 = vpop.f32.mrf.mxu0
    %v238 = vadd.f32 0.0, %v237
    %v239 = vpop.f32.mrf.mxu0
    %240 = vdwg.mxu0
    %v241 = vld [vmem:[%s4] sm:$0x1]
    %v243 = vlaneseq
    %v244 = vshrl.u32 %v243, 7
    %v245 = vsub.s32 0, %v244
    %v246 = vrot.slane %v241, %v245
    %v248 = vadd.f32 %v238, %v246
    %vm249 = vcmask 80896
    %250 = vst.msk [vmem:[#allocation8] sm:$0xff] %vm249, %v248
    // Predicated region
    $region34: #{tpu_custom_call.1} parent=1 // pred_check
      _
    $region35: #{tpu_custom_call.1} parent=1 // pred_check_branch
      %252 = sbr.rel (0) target = $region37
    $region36: #{tpu_custom_call.1} parent=1 // pred_region
      %s254 = ssub.s32 128, 128
      %255 = vsyncadd [#allocation4], %s254
      %s257 = sshll.u32 [#allocation8], 4
      %s258 = int_to_ptr.vmem [resolvable:$true] %s257
      %260 = dma.vmem_to_hbm [thread:$0]  %s258, 128, %s5, [#allocation4]
    $region37: #{tpu_custom_call.1} parent=1 // pred_fallthru
      _
    // Predicated region
    $region38: #{tpu_custom_call.1} parent=1 // pred_check
      _
    $region39: #{tpu_custom_call.1} parent=1 // pred_check_branch
      %262 = sbr.rel (0) target = $region41
    $region40: #{tpu_custom_call.1} parent=1 // pred_region
      %263 = dma.done [#allocation4], 128
    $region41: #{tpu_custom_call.1} parent=1 // pred_fallthru
      _
    %264 = vsyncpa [#allocation3], 1
    %265 = vsyncpa [#allocation6], 1
    %266 = vsyncpa [#allocation4], 1

</llo_original>
